<compile_context>
chip_gen: v7x
topology: tpu7x:2x2x1
jax: 0.10.0
libtpu: 0.0.40
codegen_flags: <defaults>
</compile_context>

<pallas_src>
import math

import jax
import jax.numpy as jnp
from jax.experimental import pallas as pl
from jax.experimental.pallas import tpu as pltpu


# ----------------------- bucket computation (tiny int math, matches the PyTorch module) --------

def _relative_position_bucket_linear(relative_position, bidirectional, num_buckets):
    assert num_buckets > 0
    if bidirectional:
        mn = -(num_buckets // 2) - (num_buckets % 2 - 1)
        mx = num_buckets // 2
    else:
        mn = -num_buckets + 1
        mx = 0
    return jnp.clip(relative_position, mn, mx) - mn


def _relative_position_bucket_loglinear(relative_position, bidirectional, num_buckets, max_distance):
    # Faithful to the reference module: max_exact = num_buckets (after the bidirectional
    # halving), so (num_buckets - max_exact) == 0 and the log-spaced term collapses to a
    # constant (then clamped to num_buckets - 1).  The general formula is kept for safety.
    n = -relative_position
    if bidirectional:
        num_buckets = num_buckets // 2
        ret = (n < 0).astype(jnp.int32) * num_buckets
        n = jnp.abs(n)
    else:
        ret = jnp.zeros_like(n)
        n = jnp.maximum(n, 0)
    max_exact = num_buckets
    is_small = n < max_exact
    if num_buckets - max_exact == 0:
        val_if_large = jnp.full_like(n, max_exact)
    else:
        scale = (num_buckets - max_exact) / math.log(max_distance / max_exact)
        n_f = jnp.maximum(n, 1).astype(jnp.float32)          # guarded; branch masked when n < max_exact
        val_if_large = max_exact + (jnp.log(n_f / float(max_exact)) * scale).astype(jnp.int32)
    val_if_large = jnp.minimum(val_if_large, num_buckets - 1)
    return ret + jnp.where(is_small, n, val_if_large)


def _bucket_matrix(qlen, klen, *, bidirectional, num_buckets, loglinear, max_distance):
    ctx = jnp.arange(qlen, dtype=jnp.int32)[:, None]
    mem = jnp.arange(klen, dtype=jnp.int32)[None, :]
    rel = mem - ctx                                          # (qlen, klen)
    if loglinear:
        return _relative_position_bucket_loglinear(rel, bidirectional, num_buckets, max_distance)
    return _relative_position_bucket_linear(rel, bidirectional, num_buckets)


# ----------------------------- Pallas kernel -----------------------------

def _rel_pos_bias_kernel(bucket_ref, wt_ref, o_ref):
    """One-hot-matmul gather: out[h, i] = weight^T[h, bucket[i]].

    bucket_ref : (1, TILE)                int8/int16/int32  flattened bucket indices
    wt_ref     : (num_heads, num_buckets) float32           transposed table, VMEM-resident
    o_ref      : (num_heads, TILE)        out_dtype         lane-dense output tile
    """
    num_buckets = wt_ref.shape[1]
    tile = bucket_ref.shape[1]
    b = bucket_ref[...].astype(jnp.int32)                                     # widen narrow ints
    bucket_ids = jax.lax.broadcasted_iota(jnp.int32, (num_buckets, tile), 0)
    onehot = (b == bucket_ids).astype(jnp.float32)                            # (num_buckets, TILE)
    o_ref[...] = jnp.dot(wt_ref[...], onehot,
                         preferred_element_type=jnp.float32).astype(o_ref.dtype)


# ----------------------------- tile selection -----------------------------

def _choose_tile(qlen, klen, t_target):
    """Pick a lane tile (multiple of 128 or == qlen*klen) that divides qlen*klen if possible."""
    qk = qlen * klen
    if qk <= t_target:
        return qk                                            # single block == full extent
    best = 0
    if klen % 128 == 0 and klen <= t_target:
        rmax = t_target // klen
        r = max(d for d in range(1, rmax + 1) if qlen % d == 0)
        best = r * klen                                      # whole q-rows per tile, exact division
    if best < t_target // 4:
        t = 128                                              # largest 128-multiple dividing qk
        while t <= t_target:
            if qk % t == 0 and t > best:
                best = t
            t += 128
    if best >= t_target // 4:
        return best
    return t_target                                          # ragged final block (Pallas masks OOB)


# ----------------------------- wrapper (the module's forward) -----------------------------

def relative_position_bias(weight, qlen, klen, *, bidirectional, loglinear,
                           max_distance=None, tile_target=32768, out_dtype=None):
    """Equivalent of RelativePositionBias.forward(qlen, klen).

    weight : (num_buckets, num_heads)  the nn.Embedding weight.
    Returns (num_heads, qlen, klen) in out_dtype (default: weight.dtype).
    """
    num_buckets, num_heads = weight.shape
    if loglinear:
        assert max_distance is not None, "If loglinear is True, max_distance must be set"
    out_dtype = weight.dtype if out_dtype is None else out_dtype

    buckets = _bucket_matrix(qlen, klen, bidirectional=bidirectional, num_buckets=num_buckets,
                             loglinear=loglinear, max_distance=max_distance)    # (qlen, klen) int32

    if num_buckets <= 127:
        idx_dtype = jnp.int8
    elif num_buckets <= 32767:
        idx_dtype = jnp.int16
    else:
        idx_dtype = jnp.int32

    qk = qlen * klen
    tile = _choose_tile(qlen, klen, tile_target)
    n_tiles = pl.cdiv(qk, tile)

    bflat = buckets.reshape(1, qk).astype(idx_dtype)          # narrow, no padding copy
    wt = weight.astype(jnp.float32).T                         # (num_heads, num_buckets)

    out = pl.pallas_call(
        _rel_pos_bias_kernel,
        out_shape=jax.ShapeDtypeStruct((num_heads, qk), out_dtype),
        grid=(n_tiles,),
        in_specs=[
            pl.BlockSpec((1, tile), lambda i: (0, i)),                  # bucket indices, lane-major
            pl.BlockSpec((num_heads, num_buckets), lambda i: (0, 0)),   # small table, VMEM-resident
        ],
        out_specs=pl.BlockSpec((num_heads, tile), lambda i: (0, i)),    # lane-dense output tile
        compiler_params=pltpu.CompilerParams(dimension_semantics=("parallel",)),
    )(bflat, wt)

    # Splitting the trailing axis is a free row-major reshape (no copy, unlike pad+slice).
    return out.reshape(num_heads, qlen, klen)


# ----------------------------- main -----------------------------

if __name__ == "__main__":
    key = jax.random.PRNGKey(0)
    num_buckets, num_heads = 32, 8
    # The module initializes the embedding weight to zeros; use small random values instead.
    weight = (0.02 * jax.random.normal(key, (num_buckets, num_heads))).astype(jnp.float32)

    cases = [
        dict(qlen=16, klen=128, bidirectional=True,  loglinear=False, max_distance=None,
             tile_target=32768, out_dtype=None),
        dict(qlen=16, klen=128, bidirectional=True,  loglinear=True,  max_distance=128,
             tile_target=32768, out_dtype=None),
        dict(qlen=8,  klen=24,  bidirectional=False, loglinear=False, max_distance=None,
             tile_target=32768, out_dtype=None),                 # klen not a multiple of 128
        dict(qlen=16, klen=256, bidirectional=True,  loglinear=False, max_distance=None,
             tile_target=512,   out_dtype=None),                 # multi-step grid (8 tiles)
        dict(qlen=16, klen=128, bidirectional=True,  loglinear=False, max_distance=None,
             tile_target=32768, out_dtype=jnp.bfloat16),         # bf16 store path
    ]

    for c in cases:
        out = relative_position_bias(weight, c["qlen"], c["klen"],
                                     bidirectional=c["bidirectional"],
                                     loglinear=c["loglinear"],
                                     max_distance=c["max_distance"],
                                     tile_target=c["tile_target"],
                                     out_dtype=c["out_dtype"])
        jax.block_until_ready(out)
        assert out.shape == (num_heads, c["qlen"], c["klen"])

        # Pure-JAX reference: embedding gather + permute([2, 0, 1]), as in compute_bias().
        buckets = _bucket_matrix(c["qlen"], c["klen"], bidirectional=c["bidirectional"],
                                 num_buckets=num_buckets, loglinear=c["loglinear"],
                                 max_distance=c["max_distance"])
        ref = jnp.transpose(weight[buckets], (2, 0, 1))
        if c["out_dtype"] is None:
            assert bool(jnp.allclose(out, ref, atol=1e-6)), "Pallas bias mismatch vs reference"
        else:
            assert bool(jnp.allclose(out.astype(jnp.float32), ref, atol=1e-3)), "bf16 bias mismatch"

    print("KERNEL_OK")
</pallas_src>

<mosaic_0001>
module attributes {stable_mosaic.version = 11 : i64} {
  func.func @_rel_pos_bias_kernel(%arg0: i32, %arg1: memref<1x2048xi8, #tpu.memory_space<vmem>>, %arg2: memref<8x32xf32, #tpu.memory_space<vmem>>, %arg3: memref<8x2048xf32, #tpu.memory_space<vmem>>) attributes {dimension_semantics = [#tpu.dimension_semantics<parallel>], iteration_bounds = array<i64: 1>, scalar_prefetch = 0 : i64, scratch_operands = 0 : i64, tpu.core_type = #tpu.core_type<tc>, window_params = [{transform_indices = @transform_0, window_bounds = array<i64: 1, 2048>}, {pipeline_mode = #tpu.pipeline_mode<synchronous>, transform_indices = @transform_1, window_bounds = array<i64: 8, 32>}, {transform_indices = @transform_2, window_bounds = array<i64: 8, 2048>}]} {
    %c0 = arith.constant 0 : index
    %c0_0 = arith.constant 0 : index
    %0 = vector.load %arg1[%c0, %c0_0] : memref<1x2048xi8, #tpu.memory_space<vmem>>, vector<1x2048xi8>
    %1 = arith.extsi %0 : vector<1x2048xi8> to vector<1x2048xi32>
    %2 = tpu.iota {dimensions = array<i32: 0>} : vector<32x2048xi32>
    %3 = vector.broadcast %1 : vector<1x2048xi32> to vector<32x2048xi32>
    %4 = arith.cmpi eq, %3, %2 : vector<32x2048xi32>
    %5 = arith.extui %4 : vector<32x2048xi1> to vector<32x2048xi32>
    %6 = arith.sitofp %5 : vector<32x2048xi32> to vector<32x2048xf32>
    %c0_1 = arith.constant 0 : index
    %c0_2 = arith.constant 0 : index
    %7 = vector.load %arg2[%c0_1, %c0_2] : memref<8x32xf32, #tpu.memory_space<vmem>>, vector<8x32xf32>
    %cst = arith.constant dense<0.000000e+00> : vector<8x2048xf32>
    %8 = tpu.matmul %7, %6, %cst {dimension_numbers = #tpu.dot_dimension_numbers<[1], [0], [0], [1], [0, 0, 1, 1], [], []>} : vector<8x32xf32>, vector<32x2048xf32>, vector<8x2048xf32> -> vector<8x2048xf32>
    %c0_3 = arith.constant 0 : index
    %c0_4 = arith.constant 0 : index
    %9 = vector.load %arg3[%c0_3, %c0_4] : memref<8x2048xf32, #tpu.memory_space<vmem>>, vector<8x2048xf32>
    tpu.vector_store %arg3[%c0_3, %c0_4], %8 {strides = array<i32>} : memref<8x2048xf32, #tpu.memory_space<vmem>>, vector<8x2048xf32>,
    return
  }
  func.func @transform_0(%arg0: i32) -> (i32, i32) {
    %c0_i32 = arith.constant 0 : i32
    %c0_i32_0 = arith.constant 0 : i32
    return %c0_i32, %arg0 : i32, i32
  }
  func.func @transform_1(%arg0: i32) -> (i32, i32) {
    %c0_i32 = arith.constant 0 : i32
    %c0_i32_0 = arith.constant 0 : i32
    %c0_i32_1 = arith.constant 0 : i32
    return %c0_i32, %c0_i32_0 : i32, i32
  }
  func.func @transform_2(%arg0: i32) -> (i32, i32) {
    %c0_i32 = arith.constant 0 : i32
    %c0_i32_0 = arith.constant 0 : i32
    return %c0_i32, %arg0 : i32, i32
  }
}

</mosaic_0001>

<llo_original>
// kernel: tpu_custom_call.1
$region0: #{tpu_custom_call.1}
  #allocation0 [shape = 'u32[]', space=smem, size = 0x4, offset = 0x4, fixed_abs, tag = 'smem constant byte address 0x4 - core index']
  #allocation1 [shape = 'u32[144,128]{1,0:T(1,128)}', space=vmem, size = 0x12000, scoped, tag = 'internal scratch']
  %s0 = inlined_call_operand.hbm [shape: s8[1,2048], index: 0, kind: input, shape index: {}]
  %s1 = inlined_call_operand.hbm [shape: f32[8,32], index: 1, kind: input, shape index: {}]
  %s2 = inlined_call_operand.hbm [shape: f32[8,2048], index: 2, kind: output, shape index: {}]
  %s3 = sld [smem:[#allocation0]]
  $region26: #{tpu_custom_call.1} parent=0
    _
  %s5 = ssub.s32 1, %s3
  %s6 = scalar_select 0, %s5, %s3
  $region1: #{tpu_custom_call.1} parent=0
    #allocation2 [shape = 'u8[8192]{0}', space=vmem, size = 0x2000, scoped, tag = 'input window, operand 0, single buffered']
    #allocation3 [shape = 's32[1]{0}', space=sflag, size = 0x4, scoped, tag = 'scoped memory for tpu_custom_call.1']
    #allocation4 [shape = 's32[1]{0}', space=sflag, size = 0x4, scoped, tag = 'scoped memory for tpu_custom_call.1']
    #allocation5 [shape = 'u8[4096]{0}', space=vmem, size = 0x1000, scoped, tag = 'input window, operand 1, single buffered']
    #allocation6 [shape = 's32[1]{0}', space=sflag, size = 0x4, scoped, tag = 'scoped memory for tpu_custom_call.1']
    #allocation7 [shape = 'u8[65536]{0}', space=vmem, size = 0x10000, scoped, tag = 'output window, operand 0, single buffered']
    %7 = vsyncpa [#allocation3], 0
    %8 = vsyncpa [#allocation6], 0
    %9 = vsyncpa [#allocation4], 0
    // Predicated region
    $region2: #{tpu_custom_call.1} parent=1 // pred_check
      _
    $region3: #{tpu_custom_call.1} parent=1 // pred_check_branch
      %11 = sbr.rel (0) target = $region5
    $region4: #{tpu_custom_call.1} parent=1 // pred_region
      %s13 = ssub.s32 256, 256
      %14 = vsyncadd [#allocation3], %s13
      %s16 = sshll.u32 [#allocation2], 4
      %s17 = int_to_ptr.vmem [resolvable:$true] %s16
      %19 = dma.hbm_to_vmem [thread:$0]  %s0, 256, %s17, [#allocation3]
    $region5: #{tpu_custom_call.1} parent=1 // pred_fallthru
      _
    // Predicated region
    $region6: #{tpu_custom_call.1} parent=1 // pred_check
      _
    $region7: #{tpu_custom_call.1} parent=1 // pred_check_branch
      %21 = sbr.rel (0) target = $region9
    $region8: #{tpu_custom_call.1} parent=1 // pred_region
      %s23 = ssub.s32 128, 128
      %24 = vsyncadd [#allocation6], %s23
      %s26 = sshll.u32 [#allocation5], 4
      %s27 = int_to_ptr.vmem [resolvable:$true] %s26
      %29 = dma.hbm_to_vmem [thread:$0]  %s1, 128, %s27, [#allocation6]
    $region9: #{tpu_custom_call.1} parent=1 // pred_fallthru
      _
    // Predicated region
    $region10: #{tpu_custom_call.1} parent=1 // pred_check
      _
    $region11: #{tpu_custom_call.1} parent=1 // pred_check_branch
      %31 = sbr.rel (0) target = $region13
    $region12: #{tpu_custom_call.1} parent=1 // pred_region
      %32 = dma.done [#allocation3], 256
    $region13: #{tpu_custom_call.1} parent=1 // pred_fallthru
      _
    // Predicated region
    $region14: #{tpu_custom_call.1} parent=1 // pred_check
      _
    $region15: #{tpu_custom_call.1} parent=1 // pred_check_branch
      %34 = sbr.rel (0) target = $region17
    $region16: #{tpu_custom_call.1} parent=1 // pred_region
      %35 = dma.done [#allocation6], 128
    $region17: #{tpu_custom_call.1} parent=1 // pred_fallthru
      _
    %v36 = vld [vmem:[#allocation2] sm:$0xff]
    %v37 = vld [vmem:[#allocation2 + $0x8] sm:$0xff]
    %v38 = vunpack.c.0.s8 %v36
    %v39 = vunpack.c.1.s8 %v36
    %v40 = vunpack.c.2.s8 %v36
    %v41 = vunpack.c.3.s8 %v36
    %v42 = vunpack.c.0.s8 %v37
    %v43 = vunpack.c.1.s8 %v37
    %v44 = vunpack.c.2.s8 %v37
    %v45 = vunpack.c.3.s8 %v37
    %v46 = vlaneseq
    %v47 = vshrl.u32 %v46, 7
    %v48 = vadd.s32 %v47, 8
    %v49 = vadd.s32 %v47, 16
    %v50 = vadd.s32 %v47, 24
    %v51 = vlaneseq
    %v52 = vshrl.u32 %v51, 7
    %v53 = vsub.s32 0, %v52
    %v54 = vrot.slane %v38, %v53
    %v55 = vlaneseq
    %v56 = vshrl.u32 %v55, 7
    %v57 = vsub.s32 4, %v56
    %v58 = vrot.slane %v38, %v57
    %v59 = vlaneseq
    %v60 = vshrl.u32 %v59, 7
    %v61 = vsub.s32 0, %v60
    %v62 = vrot.slane %v39, %v61
    %v63 = vlaneseq
    %v64 = vshrl.u32 %v63, 7
    %v65 = vsub.s32 4, %v64
    %v66 = vrot.slane %v39, %v65
    %v67 = vlaneseq
    %v68 = vshrl.u32 %v67, 7
    %v69 = vsub.s32 0, %v68
    %v70 = vrot.slane %v40, %v69
    %v71 = vlaneseq
    %v72 = vshrl.u32 %v71, 7
    %v73 = vsub.s32 4, %v72
    %v74 = vrot.slane %v40, %v73
    %v75 = vlaneseq
    %v76 = vshrl.u32 %v75, 7
    %v77 = vsub.s32 0, %v76
    %v78 = vrot.slane %v41, %v77
    %v79 = vlaneseq
    %v80 = vshrl.u32 %v79, 7
    %v81 = vsub.s32 4, %v80
    %v82 = vrot.slane %v41, %v81
    %v83 = vlaneseq
    %v84 = vshrl.u32 %v83, 7
    %v85 = vsub.s32 0, %v84
    %v86 = vrot.slane %v42, %v85
    %v87 = vlaneseq
    %v88 = vshrl.u32 %v87, 7
    %v89 = vsub.s32 4, %v88
    %v90 = vrot.slane %v42, %v89
    %v91 = vlaneseq
    %v92 = vshrl.u32 %v91, 7
    %v93 = vsub.s32 0, %v92
    %v94 = vrot.slane %v43, %v93
    %v95 = vlaneseq
    %v96 = vshrl.u32 %v95, 7
    %v97 = vsub.s32 4, %v96
    %v98 = vrot.slane %v43, %v97
    %v99 = vlaneseq
    %v100 = vshrl.u32 %v99, 7
    %v101 = vsub.s32 0, %v100
    %v102 = vrot.slane %v44, %v101
    %v103 = vlaneseq
    %v104 = vshrl.u32 %v103, 7
    %v105 = vsub.s32 4, %v104
    %v106 = vrot.slane %v44, %v105
    %v107 = vlaneseq
    %v108 = vshrl.u32 %v107, 7
    %v109 = vsub.s32 0, %v108
    %v110 = vrot.slane %v45, %v109
    %v111 = vlaneseq
    %v112 = vshrl.u32 %v111, 7
    %v113 = vsub.s32 4, %v112
    %v114 = vrot.slane %v45, %v113
    %v115 = vlaneseq
    %v116 = vshrl.u32 %v115, 7
    %v117 = vsub.s32 0, %v116
    %v118 = vrot.slane %v54, %v117
    %v119 = vlaneseq
    %v120 = vshrl.u32 %v119, 7
    %v121 = vsub.s32 0, %v120
    %v122 = vrot.slane %v58, %v121
    %v123 = vlaneseq
    %v124 = vshrl.u32 %v123, 7
    %v125 = vsub.s32 0, %v124
    %v126 = vrot.slane %v62, %v125
    %v127 = vlaneseq
    %v128 = vshrl.u32 %v127, 7
    %v129 = vsub.s32 0, %v128
    %v130 = vrot.slane %v66, %v129
    %v131 = vlaneseq
    %v132 = vshrl.u32 %v131, 7
    %v133 = vsub.s32 0, %v132
    %v134 = vrot.slane %v70, %v133
    %v135 = vlaneseq
    %v136 = vshrl.u32 %v135, 7
    %v137 = vsub.s32 0, %v136
    %v138 = vrot.slane %v74, %v137
    %v139 = vlaneseq
    %v140 = vshrl.u32 %v139, 7
    %v141 = vsub.s32 0, %v140
    %v142 = vrot.slane %v78, %v141
    %v143 = vlaneseq
    %v144 = vshrl.u32 %v143, 7
    %v145 = vsub.s32 0, %v144
    %v146 = vrot.slane %v82, %v145
    %v147 = vlaneseq
    %v148 = vshrl.u32 %v147, 7
    %v149 = vsub.s32 0, %v148
    %v150 = vrot.slane %v86, %v149
    %v151 = vlaneseq
    %v152 = vshrl.u32 %v151, 7
    %v153 = vsub.s32 0, %v152
    %v154 = vrot.slane %v90, %v153
    %v155 = vlaneseq
    %v156 = vshrl.u32 %v155, 7
    %v157 = vsub.s32 0, %v156
    %v158 = vrot.slane %v94, %v157
    %v159 = vlaneseq
    %v160 = vshrl.u32 %v159, 7
    %v161 = vsub.s32 0, %v160
    %v162 = vrot.slane %v98, %v161
    %v163 = vlaneseq
    %v164 = vshrl.u32 %v163, 7
    %v165 = vsub.s32 0, %v164
    %v166 = vrot.slane %v102, %v165
    %v167 = vlaneseq
    %v168 = vshrl.u32 %v167, 7
    %v169 = vsub.s32 0, %v168
    %v170 = vrot.slane %v106, %v169
    %v171 = vlaneseq
    %v172 = vshrl.u32 %v171, 7
    %v173 = vsub.s32 0, %v172
    %v174 = vrot.slane %v110, %v173
    %v175 = vlaneseq
    %v176 = vshrl.u32 %v175, 7
    %v177 = vsub.s32 0, %v176
    %v178 = vrot.slane %v114, %v177
    %vm179 = vcmp.eq.s32.totalorder %v118, %v47
    %vm180 = vcmp.eq.s32.totalorder %v122, %v47
    %vm181 = vcmp.eq.s32.totalorder %v126, %v47
    %vm182 = vcmp.eq.s32.totalorder %v130, %v47
    %vm183 = vcmp.eq.s32.totalorder %v134, %v47
    %vm184 = vcmp.eq.s32.totalorder %v138, %v47
    %vm185 = vcmp.eq.s32.totalorder %v142, %v47
    %vm186 = vcmp.eq.s32.totalorder %v146, %v47
    %vm187 = vcmp.eq.s32.totalorder %v150, %v47
    %vm188 = vcmp.eq.s32.totalorder %v154, %v47
    %vm189 = vcmp.eq.s32.totalorder %v158, %v47
    %vm190 = vcmp.eq.s32.totalorder %v162, %v47
    %vm191 = vcmp.eq.s32.totalorder %v166, %v47
    %vm192 = vcmp.eq.s32.totalorder %v170, %v47
    %vm193 = vcmp.eq.s32.totalorder %v174, %v47
    %vm194 = vcmp.eq.s32.totalorder %v178, %v47
    %vm195 = vcmp.eq.s32.totalorder %v118, %v48
    %vm196 = vcmp.eq.s32.totalorder %v122, %v48
    %vm197 = vcmp.eq.s32.totalorder %v126, %v48
    %vm198 = vcmp.eq.s32.totalorder %v130, %v48
    %vm199 = vcmp.eq.s32.totalorder %v134, %v48
    %vm200 = vcmp.eq.s32.totalorder %v138, %v48
    %vm201 = vcmp.eq.s32.totalorder %v142, %v48
    %vm202 = vcmp.eq.s32.totalorder %v146, %v48
    %vm203 = vcmp.eq.s32.totalorder %v150, %v48
    %vm204 = vcmp.eq.s32.totalorder %v154, %v48
    %vm205 = vcmp.eq.s32.totalorder %v158, %v48
    %vm206 = vcmp.eq.s32.totalorder %v162, %v48
    %vm207 = vcmp.eq.s32.totalorder %v166, %v48
    %vm208 = vcmp.eq.s32.totalorder %v170, %v48
    %vm209 = vcmp.eq.s32.totalorder %v174, %v48
    %vm210 = vcmp.eq.s32.totalorder %v178, %v48
    %vm211 = vcmp.eq.s32.totalorder %v118, %v49
    %vm212 = vcmp.eq.s32.totalorder %v122, %v49
    %vm213 = vcmp.eq.s32.totalorder %v126, %v49
    %vm214 = vcmp.eq.s32.totalorder %v130, %v49
    %vm215 = vcmp.eq.s32.totalorder %v134, %v49
    %vm216 = vcmp.eq.s32.totalorder %v138, %v49
    %vm217 = vcmp.eq.s32.totalorder %v142, %v49
    %vm218 = vcmp.eq.s32.totalorder %v146, %v49
    %vm219 = vcmp.eq.s32.totalorder %v150, %v49
    %vm220 = vcmp.eq.s32.totalorder %v154, %v49
    %vm221 = vcmp.eq.s32.totalorder %v158, %v49
    %vm222 = vcmp.eq.s32.totalorder %v162, %v49
    %vm223 = vcmp.eq.s32.totalorder %v166, %v49
    %vm224 = vcmp.eq.s32.totalorder %v170, %v49
    %vm225 = vcmp.eq.s32.totalorder %v174, %v49
    %vm226 = vcmp.eq.s32.totalorder %v178, %v49
    %vm227 = vcmp.eq.s32.totalorder %v118, %v50
    %vm228 = vcmp.eq.s32.totalorder %v122, %v50
    %vm229 = vcmp.eq.s32.totalorder %v126, %v50
    %vm230 = vcmp.eq.s32.totalorder %v130, %v50
    %vm231 = vcmp.eq.s32.totalorder %v134, %v50
    %vm232 = vcmp.eq.s32.totalorder %v138, %v50
    %vm233 = vcmp.eq.s32.totalorder %v142, %v50
    %vm234 = vcmp.eq.s32.totalorder %v146, %v50
    %vm235 = vcmp.eq.s32.totalorder %v150, %v50
    %vm236 = vcmp.eq.s32.totalorder %v154, %v50
    %vm237 = vcmp.eq.s32.totalorder %v158, %v50
    %vm238 = vcmp.eq.s32.totalorder %v162, %v50
    %vm239 = vcmp.eq.s32.totalorder %v166, %v50
    %vm240 = vcmp.eq.s32.totalorder %v170, %v50
    %vm241 = vcmp.eq.s32.totalorder %v174, %v50
    %vm242 = vcmp.eq.s32.totalorder %v178, %v50
    %v243 = vsel %vm179, 1, 0
    %v244 = vsel %vm180, 1, 0
    %v245 = vsel %vm181, 1, 0
    %v246 = vsel %vm182, 1, 0
    %v247 = vsel %vm183, 1, 0
    %v248 = vsel %vm184, 1, 0
    %v249 = vsel %vm185, 1, 0
    %v250 = vsel %vm186, 1, 0
    %v251 = vsel %vm187, 1, 0
    %v252 = vsel %vm188, 1, 0
    %v253 = vsel %vm189, 1, 0
    %v254 = vsel %vm190, 1, 0
    %v255 = vsel %vm191, 1, 0
    %v256 = vsel %vm192, 1, 0
    %v257 = vsel %vm193, 1, 0
    %v258 = vsel %vm194, 1, 0
    %v259 = vsel %vm195, 1, 0
    %v260 = vsel %vm196, 1, 0
    %v261 = vsel %vm197, 1, 0
    %v262 = vsel %vm198, 1, 0
    %v263 = vsel %vm199, 1, 0
    %v264 = vsel %vm200, 1, 0
    %v265 = vsel %vm201, 1, 0
    %v266 = vsel %vm202, 1, 0
    %v267 = vsel %vm203, 1, 0
    %v268 = vsel %vm204, 1, 0
    %v269 = vsel %vm205, 1, 0
    %v270 = vsel %vm206, 1, 0
    %v271 = vsel %vm207, 1, 0
    %v272 = vsel %vm208, 1, 0
    %v273 = vsel %vm209, 1, 0
    %v274 = vsel %vm210, 1, 0
    %v275 = vsel %vm211, 1, 0
    %v276 = vsel %vm212, 1, 0
    %v277 = vsel %vm213, 1, 0
    %v278 = vsel %vm214, 1, 0
    %v279 = vsel %vm215, 1, 0
    %v280 = vsel %vm216, 1, 0
    %v281 = vsel %vm217, 1, 0
    %v282 = vsel %vm218, 1, 0
    %v283 = vsel %vm219, 1, 0
    %v284 = vsel %vm220, 1, 0
    %v285 = vsel %vm221, 1, 0
    %v286 = vsel %vm222, 1, 0
    %v287 = vsel %vm223, 1, 0
    %v288 = vsel %vm224, 1, 0
    %v289 = vsel %vm225, 1, 0
    %v290 = vsel %vm226, 1, 0
    %v291 = vsel %vm227, 1, 0
    %v292 = vsel %vm228, 1, 0
    %v293 = vsel %vm229, 1, 0
    %v294 = vsel %vm230, 1, 0
    %v295 = vsel %vm231, 1, 0
    %v296 = vsel %vm232, 1, 0
    %v297 = vsel %vm233, 1, 0
    %v298 = vsel %vm234, 1, 0
    %v299 = vsel %vm235, 1, 0
    %v300 = vsel %vm236, 1, 0
    %v301 = vsel %vm237, 1, 0
    %v302 = vsel %vm238, 1, 0
    %v303 = vsel %vm239, 1, 0
    %v304 = vsel %vm240, 1, 0
    %v305 = vsel %vm241, 1, 0
    %v306 = vsel %vm242, 1, 0
    %v307 = vcvt.s32.f32 %v243
    %v308 = vcvt.s32.f32 %v244
    %v309 = vcvt.s32.f32 %v245
    %v310 = vcvt.s32.f32 %v246
    %v311 = vcvt.s32.f32 %v247
    %v312 = vcvt.s32.f32 %v248
    %v313 = vcvt.s32.f32 %v249
    %v314 = vcvt.s32.f32 %v250
    %v315 = vcvt.s32.f32 %v251
    %v316 = vcvt.s32.f32 %v252
    %v317 = vcvt.s32.f32 %v253
    %v318 = vcvt.s32.f32 %v254
    %v319 = vcvt.s32.f32 %v255
    %v320 = vcvt.s32.f32 %v256
    %v321 = vcvt.s32.f32 %v257
    %v322 = vcvt.s32.f32 %v258
    %v323 = vcvt.s32.f32 %v259
    %v324 = vcvt.s32.f32 %v260
    %v325 = vcvt.s32.f32 %v261
    %v326 = vcvt.s32.f32 %v262
    %v327 = vcvt.s32.f32 %v263
    %v328 = vcvt.s32.f32 %v264
    %v329 = vcvt.s32.f32 %v265
    %v330 = vcvt.s32.f32 %v266
    %v331 = vcvt.s32.f32 %v267
    %v332 = vcvt.s32.f32 %v268
    %v333 = vcvt.s32.f32 %v269
    %v334 = vcvt.s32.f32 %v270
    %v335 = vcvt.s32.f32 %v271
    %v336 = vcvt.s32.f32 %v272
    %v337 = vcvt.s32.f32 %v273
    %v338 = vcvt.s32.f32 %v274
    %v339 = vcvt.s32.f32 %v275
    %v340 = vcvt.s32.f32 %v276
    %v341 = vcvt.s32.f32 %v277
    %v342 = vcvt.s32.f32 %v278
    %v343 = vcvt.s32.f32 %v279
    %v344 = vcvt.s32.f32 %v280
    %v345 = vcvt.s32.f32 %v281
    %v346 = vcvt.s32.f32 %v282
    %v347 = vcvt.s32.f32 %v283
    %v348 = vcvt.s32.f32 %v284
    %v349 = vcvt.s32.f32 %v285
    %v350 = vcvt.s32.f32 %v286
    %v351 = vcvt.s32.f32 %v287
    %v352 = vcvt.s32.f32 %v288
    %v353 = vcvt.s32.f32 %v289
    %v354 = vcvt.s32.f32 %v290
    %v355 = vcvt.s32.f32 %v291
    %v356 = vcvt.s32.f32 %v292
    %v357 = vcvt.s32.f32 %v293
    %v358 = vcvt.s32.f32 %v294
    %v359 = vcvt.s32.f32 %v295
    %v360 = vcvt.s32.f32 %v296
    %v361 = vcvt.s32.f32 %v297
    %v362 = vcvt.s32.f32 %v298
    %v363 = vcvt.s32.f32 %v299
    %v364 = vcvt.s32.f32 %v300
    %v365 = vcvt.s32.f32 %v301
    %v366 = vcvt.s32.f32 %v302
    %v367 = vcvt.s32.f32 %v303
    %v368 = vcvt.s32.f32 %v304
    %v369 = vcvt.s32.f32 %v305
    %v370 = vcvt.s32.f32 %v306
    %v371 = vld [vmem:[#allocation5] sm:$0xff]
    %vm372 = vcmask 261120
    %v374 = vsel %vm372, %v371, 0
    %376 = vmatprep.subr.mxu0 %v308
    %377 = vmatpush1.msra.mxu0 %v307
    %378 = vmatprep.subr.mxu0 %v324
    %379 = vmatpush1.msra.mxu0 %v323
    %380 = vmatprep.subr.mxu0 %v340
    %381 = vmatpush1.msra.mxu0 %v339
    %382 = vmatprep.subr.mxu0 %v356
    %383 = vmatpush1.msra.mxu0 %v355
    %384 = vmatprep.subr.mxu0 0.0
    %385 = vmatpush1.msra.mxu0 0.0
    %386 = vmatprep.subr.mxu0 0.0
    %387 = vmatpush1.msra.mxu0 0.0
    %388 = vmatprep.subr.mxu0 0.0
    %389 = vmatpush1.msra.mxu0 0.0
    %390 = vmatprep.subr.mxu0 0.0
    %391 = vmatpush1.msra.mxu0 0.0
    %392 = vmatprep.subr.mxu0 0.0
    %393 = vmatpush1.msra.mxu0 0.0
    %394 = vmatprep.subr.mxu0 0.0
    %395 = vmatpush1.msra.mxu0 0.0
    %396 = vmatprep.subr.mxu0 0.0
    %397 = vmatpush1.msra.mxu0 0.0
    %398 = vmatprep.subr.mxu0 0.0
    %399 = vmatpush1.msra.mxu0 0.0
    %400 = vmatprep.subr.mxu0 0.0
    %401 = vmatpush1.msra.mxu0 0.0
    %402 = vmatprep.subr.mxu0 0.0
    %403 = vmatpush1.msra.mxu0 0.0
    %404 = vmatprep.subr.mxu0 0.0
    %405 = vmatpush1.msra.mxu0 0.0
    %406 = vmatprep.subr.mxu0 0.0
    %407 = vmatpush1.msra.mxu0 0.0
    %408 = vmatprep.subr.mxu0 0.0
    %409 = vmatpush1.msra.mxu0 0.0
    %410 = vmatprep.subr.mxu0 0.0
    %411 = vmatpush1.msra.mxu0 0.0
    %412 = vmatprep.subr.mxu0 0.0
    %413 = vmatpush1.msra.mxu0 0.0
    %414 = vmatprep.subr.mxu0 0.0
    %415 = vmatpush1.msra.mxu0 0.0
    %416 = vmatprep.subr.mxu0 0.0
    %417 = vmatpush1.msra.mxu0 0.0
    %418 = vmatprep.subr.mxu0 0.0
    %419 = vmatpush1.msra.mxu0 0.0
    %420 = vmatprep.subr.mxu0 0.0
    %421 = vmatpush1.msra.mxu0 0.0
    %422 = vmatprep.subr.mxu0 0.0
    %423 = vmatpush1.msra.mxu0 0.0
    %424 = vmatprep.subr.mxu0 0.0
    %425 = vmatpush1.msra.mxu0 0.0
    %426 = vmatprep.subr.mxu0 0.0
    %427 = vmatpush1.msra.mxu0 0.0
    %428 = vmatprep.subr.mxu0 0.0
    %429 = vmatpush1.msra.mxu0 0.0
    %430 = vmatprep.subr.mxu0 0.0
    %431 = vmatpush1.msra.mxu0 0.0
    %432 = vmatprep.subr.mxu0 0.0
    %433 = vmatpush1.msra.mxu0 0.0
    %434 = vmatprep.subr.mxu0 0.0
    %435 = vmatpush1.msra.mxu0 0.0
    %436 = vmatprep.subr.mxu0 0.0
    %437 = vmatpush1.msra.mxu0 0.0
    %438 = vmatprep.subr.mxu0 0.0
    %439 = vmatpush1.msra.mxu0 0.0
    %440 = vmatprep.mubr.f32.mxu0 0.0
    %441 = vmatmul.mubr.f32.gmra.mrb[0].mxu0 %v374
    %v442 = vpop.f32.mrb[0].mxu0
    %v443 = vadd.f32 0.0, %v442
    %v444 = vpop.f32.mrb[0].mxu0
    %v445 = vadd.f32 0.0, %v444
    %446 = vdwg.mxu0
    %447 = vmatprep.subr.mxu0 %v310
    %448 = vmatpush1.msra.mxu0 %v309
    %449 = vmatprep.subr.mxu0 %v326
    %450 = vmatpush1.msra.mxu0 %v325
    %451 = vmatprep.subr.mxu0 %v342
    %452 = vmatpush1.msra.mxu0 %v341
    %453 = vmatprep.subr.mxu0 %v358
    %454 = vmatpush1.msra.mxu0 %v357
    %455 = vmatprep.subr.mxu0 0.0
    %456 = vmatpush1.msra.mxu0 0.0
    %457 = vmatprep.subr.mxu0 0.0
    %458 = vmatpush1.msra.mxu0 0.0
    %459 = vmatprep.subr.mxu0 0.0
    %460 = vmatpush1.msra.mxu0 0.0
    %461 = vmatprep.subr.mxu0 0.0
    %462 = vmatpush1.msra.mxu0 0.0
    %463 = vmatprep.subr.mxu0 0.0
    %464 = vmatpush1.msra.mxu0 0.0
    %465 = vmatprep.subr.mxu0 0.0
    %466 = vmatpush1.msra.mxu0 0.0
    %467 = vmatprep.subr.mxu0 0.0
    %468 = vmatpush1.msra.mxu0 0.0
    %469 = vmatprep.subr.mxu0 0.0
    %470 = vmatpush1.msra.mxu0 0.0
    %471 = vmatprep.subr.mxu0 0.0
    %472 = vmatpush1.msra.mxu0 0.0
    %473 = vmatprep.subr.mxu0 0.0
    %474 = vmatpush1.msra.mxu0 0.0
    %475 = vmatprep.subr.mxu0 0.0
    %476 = vmatpush1.msra.mxu0 0.0
    %477 = vmatprep.subr.mxu0 0.0
    %478 = vmatpush1.msra.mxu0 0.0
    %479 = vmatprep.subr.mxu0 0.0
    %480 = vmatpush1.msra.mxu0 0.0
    %481 = vmatprep.subr.mxu0 0.0
    %482 = vmatpush1.msra.mxu0 0.0
    %483 = vmatprep.subr.mxu0 0.0
    %484 = vmatpush1.msra.mxu0 0.0
    %485 = vmatprep.subr.mxu0 0.0
    %486 = vmatpush1.msra.mxu0 0.0
    %487 = vmatprep.subr.mxu0 0.0
    %488 = vmatpush1.msra.mxu0 0.0
    %489 = vmatprep.subr.mxu0 0.0
    %490 = vmatpush1.msra.mxu0 0.0
    %491 = vmatprep.subr.mxu0 0.0
    %492 = vmatpush1.msra.mxu0 0.0
    %493 = vmatprep.subr.mxu0 0.0
    %494 = vmatpush1.msra.mxu0 0.0
    %495 = vmatprep.subr.mxu0 0.0
    %496 = vmatpush1.msra.mxu0 0.0
    %497 = vmatprep.subr.mxu0 0.0
    %498 = vmatpush1.msra.mxu0 0.0
    %499 = vmatprep.subr.mxu0 0.0
    %500 = vmatpush1.msra.mxu0 0.0
    %501 = vmatprep.subr.mxu0 0.0
    %502 = vmatpush1.msra.mxu0 0.0
    %503 = vmatprep.subr.mxu0 0.0
    %504 = vmatpush1.msra.mxu0 0.0
    %505 = vmatprep.subr.mxu0 0.0
    %506 = vmatpush1.msra.mxu0 0.0
    %507 = vmatprep.subr.mxu0 0.0
    %508 = vmatpush1.msra.mxu0 0.0
    %509 = vmatprep.subr.mxu0 0.0
    %510 = vmatpush1.msra.mxu0 0.0
    %511 = vmatprep.mubr.f32.mxu0 0.0
    %512 = vmatmul.mubr.f32.gmra.mrb[0].mxu0 %v374
    %v513 = vpop.f32.mrb[0].mxu0
    %v514 = vadd.f32 0.0, %v513
    %v515 = vpop.f32.mrb[0].mxu0
    %v516 = vadd.f32 0.0, %v515
    %517 = vdwg.mxu0
    %518 = vmatprep.subr.mxu0 %v312
    %519 = vmatpush1.msra.mxu0 %v311
    %520 = vmatprep.subr.mxu0 %v328
    %521 = vmatpush1.msra.mxu0 %v327
    %522 = vmatprep.subr.mxu0 %v344
    %523 = vmatpush1.msra.mxu0 %v343
    %524 = vmatprep.subr.mxu0 %v360
    %525 = vmatpush1.msra.mxu0 %v359
    %526 = vmatprep.subr.mxu0 0.0
    %527 = vmatpush1.msra.mxu0 0.0
    %528 = vmatprep.subr.mxu0 0.0
    %529 = vmatpush1.msra.mxu0 0.0
    %530 = vmatprep.subr.mxu0 0.0
    %531 = vmatpush1.msra.mxu0 0.0
    %532 = vmatprep.subr.mxu0 0.0
    %533 = vmatpush1.msra.mxu0 0.0
    %534 = vmatprep.subr.mxu0 0.0
    %535 = vmatpush1.msra.mxu0 0.0
    %536 = vmatprep.subr.mxu0 0.0
    %537 = vmatpush1.msra.mxu0 0.0
    %538 = vmatprep.subr.mxu0 0.0
    %539 = vmatpush1.msra.mxu0 0.0
    %540 = vmatprep.subr.mxu0 0.0
    %541 = vmatpush1.msra.mxu0 0.0
    %542 = vmatprep.subr.mxu0 0.0
    %543 = vmatpush1.msra.mxu0 0.0
    %544 = vmatprep.subr.mxu0 0.0
    %545 = vmatpush1.msra.mxu0 0.0
    %546 = vmatprep.subr.mxu0 0.0
    %547 = vmatpush1.msra.mxu0 0.0
    %548 = vmatprep.subr.mxu0 0.0
    %549 = vmatpush1.msra.mxu0 0.0
    %550 = vmatprep.subr.mxu0 0.0
    %551 = vmatpush1.msra.mxu0 0.0
    %552 = vmatprep.subr.mxu0 0.0
    %553 = vmatpush1.msra.mxu0 0.0
    %554 = vmatprep.subr.mxu0 0.0
    %555 = vmatpush1.msra.mxu0 0.0
    %556 = vmatprep.subr.mxu0 0.0
    %557 = vmatpush1.msra.mxu0 0.0
    %558 = vmatprep.subr.mxu0 0.0
    %559 = vmatpush1.msra.mxu0 0.0
    %560 = vmatprep.subr.mxu0 0.0
    %561 = vmatpush1.msra.mxu0 0.0
    %562 = vmatprep.subr.mxu0 0.0
    %563 = vmatpush1.msra.mxu0 0.0
    %564 = vmatprep.subr.mxu0 0.0
    %565 = vmatpush1.msra.mxu0 0.0
    %566 = vmatprep.subr.mxu0 0.0
    %567 = vmatpush1.msra.mxu0 0.0
    %568 = vmatprep.subr.mxu0 0.0
    %569 = vmatpush1.msra.mxu0 0.0
    %570 = vmatprep.subr.mxu0 0.0
    %571 = vmatpush1.msra.mxu0 0.0
    %572 = vmatprep.subr.mxu0 0.0
    %573 = vmatpush1.msra.mxu0 0.0
    %574 = vmatprep.subr.mxu0 0.0
    %575 = vmatpush1.msra.mxu0 0.0
    %576 = vmatprep.subr.mxu0 0.0
    %577 = vmatpush1.msra.mxu0 0.0
    %578 = vmatprep.subr.mxu0 0.0
    %579 = vmatpush1.msra.mxu0 0.0
    %580 = vmatprep.subr.mxu0 0.0
    %581 = vmatpush1.msra.mxu0 0.0
    %582 = vmatprep.mubr.f32.mxu0 0.0
    %583 = vmatmul.mubr.f32.gmra.mrb[0].mxu0 %v374
    %v584 = vpop.f32.mrb[0].mxu0
    %v585 = vadd.f32 0.0, %v584
    %v586 = vpop.f32.mrb[0].mxu0
    %v587 = vadd.f32 0.0, %v586
    %588 = vdwg.mxu0
    %589 = vmatprep.subr.mxu0 %v314
    %590 = vmatpush1.msra.mxu0 %v313
    %591 = vmatprep.subr.mxu0 %v330
    %592 = vmatpush1.msra.mxu0 %v329
    %593 = vmatprep.subr.mxu0 %v346
    %594 = vmatpush1.msra.mxu0 %v345
    %595 = vmatprep.subr.mxu0 %v362
    %596 = vmatpush1.msra.mxu0 %v361
    %597 = vmatprep.subr.mxu0 0.0
    %598 = vmatpush1.msra.mxu0 0.0
    %599 = vmatprep.subr.mxu0 0.0
    %600 = vmatpush1.msra.mxu0 0.0
    %601 = vmatprep.subr.mxu0 0.0
    %602 = vmatpush1.msra.mxu0 0.0
    %603 = vmatprep.subr.mxu0 0.0
    %604 = vmatpush1.msra.mxu0 0.0
    %605 = vmatprep.subr.mxu0 0.0
    %606 = vmatpush1.msra.mxu0 0.0
    %607 = vmatprep.subr.mxu0 0.0
    %608 = vmatpush1.msra.mxu0 0.0
    %609 = vmatprep.subr.mxu0 0.0
    %610 = vmatpush1.msra.mxu0 0.0
    %611 = vmatprep.subr.mxu0 0.0
    %612 = vmatpush1.msra.mxu0 0.0
    %613 = vmatprep.subr.mxu0 0.0
    %614 = vmatpush1.msra.mxu0 0.0
    %615 = vmatprep.subr.mxu0 0.0
    %616 = vmatpush1.msra.mxu0 0.0
    %617 = vmatprep.subr.mxu0 0.0
    %618 = vmatpush1.msra.mxu0 0.0
    %619 = vmatprep.subr.mxu0 0.0
    %620 = vmatpush1.msra.mxu0 0.0
    %621 = vmatprep.subr.mxu0 0.0
    %622 = vmatpush1.msra.mxu0 0.0
    %623 = vmatprep.subr.mxu0 0.0
    %624 = vmatpush1.msra.mxu0 0.0
    %625 = vmatprep.subr.mxu0 0.0
    %626 = vmatpush1.msra.mxu0 0.0
    %627 = vmatprep.subr.mxu0 0.0
    %628 = vmatpush1.msra.mxu0 0.0
    %629 = vmatprep.subr.mxu0 0.0
    %630 = vmatpush1.msra.mxu0 0.0
    %631 = vmatprep.subr.mxu0 0.0
    %632 = vmatpush1.msra.mxu0 0.0
    %633 = vmatprep.subr.mxu0 0.0
    %634 = vmatpush1.msra.mxu0 0.0
    %635 = vmatprep.subr.mxu0 0.0
    %636 = vmatpush1.msra.mxu0 0.0
    %637 = vmatprep.subr.mxu0 0.0
    %638 = vmatpush1.msra.mxu0 0.0
    %639 = vmatprep.subr.mxu0 0.0
    %640 = vmatpush1.msra.mxu0 0.0
    %641 = vmatprep.subr.mxu0 0.0
    %642 = vmatpush1.msra.mxu0 0.0
    %643 = vmatprep.subr.mxu0 0.0
    %644 = vmatpush1.msra.mxu0 0.0
    %645 = vmatprep.subr.mxu0 0.0
    %646 = vmatpush1.msra.mxu0 0.0
    %647 = vmatprep.subr.mxu0 0.0
    %648 = vmatpush1.msra.mxu0 0.0
    %649 = vmatprep.subr.mxu0 0.0
    %650 = vmatpush1.msra.mxu0 0.0
    %651 = vmatprep.subr.mxu0 0.0
    %652 = vmatpush1.msra.mxu0 0.0
    %653 = vmatprep.mubr.f32.mxu0 0.0
    %654 = vmatmul.mubr.f32.gmra.mrb[0].mxu0 %v374
    %v655 = vpop.f32.mrb[0].mxu0
    %v656 = vadd.f32 0.0, %v655
    %v657 = vpop.f32.mrb[0].mxu0
    %v658 = vadd.f32 0.0, %v657
    %659 = vdwg.mxu0
    %660 = vmatprep.subr.mxu0 %v316
    %661 = vmatpush1.msra.mxu0 %v315
    %662 = vmatprep.subr.mxu0 %v332
    %663 = vmatpush1.msra.mxu0 %v331
    %664 = vmatprep.subr.mxu0 %v348
    %665 = vmatpush1.msra.mxu0 %v347
    %666 = vmatprep.subr.mxu0 %v364
    %667 = vmatpush1.msra.mxu0 %v363
    %668 = vmatprep.subr.mxu0 0.0
    %669 = vmatpush1.msra.mxu0 0.0
    %670 = vmatprep.subr.mxu0 0.0
    %671 = vmatpush1.msra.mxu0 0.0
    %672 = vmatprep.subr.mxu0 0.0
    %673 = vmatpush1.msra.mxu0 0.0
    %674 = vmatprep.subr.mxu0 0.0
    %675 = vmatpush1.msra.mxu0 0.0
    %676 = vmatprep.subr.mxu0 0.0
    %677 = vmatpush1.msra.mxu0 0.0
    %678 = vmatprep.subr.mxu0 0.0
    %679 = vmatpush1.msra.mxu0 0.0
    %680 = vmatprep.subr.mxu0 0.0
    %681 = vmatpush1.msra.mxu0 0.0
    %682 = vmatprep.subr.mxu0 0.0
    %683 = vmatpush1.msra.mxu0 0.0
    %684 = vmatprep.subr.mxu0 0.0
    %685 = vmatpush1.msra.mxu0 0.0
    %686 = vmatprep.subr.mxu0 0.0
    %687 = vmatpush1.msra.mxu0 0.0
    %688 = vmatprep.subr.mxu0 0.0
    %689 = vmatpush1.msra.mxu0 0.0
    %690 = vmatprep.subr.mxu0 0.0
    %691 = vmatpush1.msra.mxu0 0.0
    %692 = vmatprep.subr.mxu0 0.0
    %693 = vmatpush1.msra.mxu0 0.0
    %694 = vmatprep.subr.mxu0 0.0
    %695 = vmatpush1.msra.mxu0 0.0
    %696 = vmatprep.subr.mxu0 0.0
    %697 = vmatpush1.msra.mxu0 0.0
    %698 = vmatprep.subr.mxu0 0.0
    %699 = vmatpush1.msra.mxu0 0.0
    %700 = vmatprep.subr.mxu0 0.0
    %701 = vmatpush1.msra.mxu0 0.0
    %702 = vmatprep.subr.mxu0 0.0
    %703 = vmatpush1.msra.mxu0 0.0
    %704 = vmatprep.subr.mxu0 0.0
    %705 = vmatpush1.msra.mxu0 0.0
    %706 = vmatprep.subr.mxu0 0.0
    %707 = vmatpush1.msra.mxu0 0.0
    %708 = vmatprep.subr.mxu0 0.0
    %709 = vmatpush1.msra.mxu0 0.0
    %710 = vmatprep.subr.mxu0 0.0
    %711 = vmatpush1.msra.mxu0 0.0
    %712 = vmatprep.subr.mxu0 0.0
    %713 = vmatpush1.msra.mxu0 0.0
    %714 = vmatprep.subr.mxu0 0.0
    %715 = vmatpush1.msra.mxu0 0.0
    %716 = vmatprep.subr.mxu0 0.0
    %717 = vmatpush1.msra.mxu0 0.0
    %718 = vmatprep.subr.mxu0 0.0
    %719 = vmatpush1.msra.mxu0 0.0
    %720 = vmatprep.subr.mxu0 0.0
    %721 = vmatpush1.msra.mxu0 0.0
    %722 = vmatprep.subr.mxu0 0.0
    %723 = vmatpush1.msra.mxu0 0.0
    %724 = vmatprep.mubr.f32.mxu0 0.0
    %725 = vmatmul.mubr.f32.gmra.mrb[0].mxu0 %v374
    %v726 = vpop.f32.mrb[0].mxu0
    %v727 = vadd.f32 0.0, %v726
    %v728 = vpop.f32.mrb[0].mxu0
    %v729 = vadd.f32 0.0, %v728
    %730 = vdwg.mxu0
    %731 = vmatprep.subr.mxu0 %v318
    %732 = vmatpush1.msra.mxu0 %v317
    %733 = vmatprep.subr.mxu0 %v334
    %734 = vmatpush1.msra.mxu0 %v333
    %735 = vmatprep.subr.mxu0 %v350
    %736 = vmatpush1.msra.mxu0 %v349
    %737 = vmatprep.subr.mxu0 %v366
    %738 = vmatpush1.msra.mxu0 %v365
    %739 = vmatprep.subr.mxu0 0.0
    %740 = vmatpush1.msra.mxu0 0.0
    %741 = vmatprep.subr.mxu0 0.0
    %742 = vmatpush1.msra.mxu0 0.0
    %743 = vmatprep.subr.mxu0 0.0
    %744 = vmatpush1.msra.mxu0 0.0
    %745 = vmatprep.subr.mxu0 0.0
    %746 = vmatpush1.msra.mxu0 0.0
    %747 = vmatprep.subr.mxu0 0.0
    %748 = vmatpush1.msra.mxu0 0.0
    %749 = vmatprep.subr.mxu0 0.0
    %750 = vmatpush1.msra.mxu0 0.0
    %751 = vmatprep.subr.mxu0 0.0
    %752 = vmatpush1.msra.mxu0 0.0
    %753 = vmatprep.subr.mxu0 0.0
    %754 = vmatpush1.msra.mxu0 0.0
    %755 = vmatprep.subr.mxu0 0.0
    %756 = vmatpush1.msra.mxu0 0.0
    %757 = vmatprep.subr.mxu0 0.0
    %758 = vmatpush1.msra.mxu0 0.0
    %759 = vmatprep.subr.mxu0 0.0
    %760 = vmatpush1.msra.mxu0 0.0
    %761 = vmatprep.subr.mxu0 0.0
    %762 = vmatpush1.msra.mxu0 0.0
    %763 = vmatprep.subr.mxu0 0.0
    %764 = vmatpush1.msra.mxu0 0.0
    %765 = vmatprep.subr.mxu0 0.0
    %766 = vmatpush1.msra.mxu0 0.0
    %767 = vmatprep.subr.mxu0 0.0
    %768 = vmatpush1.msra.mxu0 0.0
    %769 = vmatprep.subr.mxu0 0.0
    %770 = vmatpush1.msra.mxu0 0.0
    %771 = vmatprep.subr.mxu0 0.0
    %772 = vmatpush1.msra.mxu0 0.0
    %773 = vmatprep.subr.mxu0 0.0
    %774 = vmatpush1.msra.mxu0 0.0
    %775 = vmatprep.subr.mxu0 0.0
    %776 = vmatpush1.msra.mxu0 0.0
    %777 = vmatprep.subr.mxu0 0.0
    %778 = vmatpush1.msra.mxu0 0.0
    %779 = vmatprep.subr.mxu0 0.0
    %780 = vmatpush1.msra.mxu0 0.0
    %781 = vmatprep.subr.mxu0 0.0
    %782 = vmatpush1.msra.mxu0 0.0
    %783 = vmatprep.subr.mxu0 0.0
    %784 = vmatpush1.msra.mxu0 0.0
    %785 = vmatprep.subr.mxu0 0.0
    %786 = vmatpush1.msra.mxu0 0.0
    %787 = vmatprep.subr.mxu0 0.0
    %788 = vmatpush1.msra.mxu0 0.0
    %789 = vmatprep.subr.mxu0 0.0
    %790 = vmatpush1.msra.mxu0 0.0
    %791 = vmatprep.subr.mxu0 0.0
    %792 = vmatpush1.msra.mxu0 0.0
    %793 = vmatprep.subr.mxu0 0.0
    %794 = vmatpush1.msra.mxu0 0.0
    %795 = vmatprep.mubr.f32.mxu0 0.0
    %796 = vmatmul.mubr.f32.gmra.mrb[0].mxu0 %v374
    %v797 = vpop.f32.mrb[0].mxu0
    %v798 = vadd.f32 0.0, %v797
    %v799 = vpop.f32.mrb[0].mxu0
    %v800 = vadd.f32 0.0, %v799
    %801 = vdwg.mxu0
    %802 = vmatprep.subr.mxu0 %v320
    %803 = vmatpush1.msra.mxu0 %v319
    %804 = vmatprep.subr.mxu0 %v336
    %805 = vmatpush1.msra.mxu0 %v335
    %806 = vmatprep.subr.mxu0 %v352
    %807 = vmatpush1.msra.mxu0 %v351
    %808 = vmatprep.subr.mxu0 %v368
    %809 = vmatpush1.msra.mxu0 %v367
    %810 = vmatprep.subr.mxu0 0.0
    %811 = vmatpush1.msra.mxu0 0.0
    %812 = vmatprep.subr.mxu0 0.0
    %813 = vmatpush1.msra.mxu0 0.0
    %814 = vmatprep.subr.mxu0 0.0
    %815 = vmatpush1.msra.mxu0 0.0
    %816 = vmatprep.subr.mxu0 0.0
    %817 = vmatpush1.msra.mxu0 0.0
    %818 = vmatprep.subr.mxu0 0.0
    %819 = vmatpush1.msra.mxu0 0.0
    %820 = vmatprep.subr.mxu0 0.0
    %821 = vmatpush1.msra.mxu0 0.0
    %822 = vmatprep.subr.mxu0 0.0
    %823 = vmatpush1.msra.mxu0 0.0
    %824 = vmatprep.subr.mxu0 0.0
    %825 = vmatpush1.msra.mxu0 0.0
    %826 = vmatprep.subr.mxu0 0.0
    %827 = vmatpush1.msra.mxu0 0.0
    %828 = vmatprep.subr.mxu0 0.0
    %829 = vmatpush1.msra.mxu0 0.0
    %830 = vmatprep.subr.mxu0 0.0
    %831 = vmatpush1.msra.mxu0 0.0
    %832 = vmatprep.subr.mxu0 0.0
    %833 = vmatpush1.msra.mxu0 0.0
    %834 = vmatprep.subr.mxu0 0.0
    %835 = vmatpush1.msra.mxu0 0.0
    %836 = vmatprep.subr.mxu0 0.0
    %837 = vmatpush1.msra.mxu0 0.0
    %838 = vmatprep.subr.mxu0 0.0
    %839 = vmatpush1.msra.mxu0 0.0
    %840 = vmatprep.subr.mxu0 0.0
    %841 = vmatpush1.msra.mxu0 0.0
    %842 = vmatprep.subr.mxu0 0.0
    %843 = vmatpush1.msra.mxu0 0.0
    %844 = vmatprep.subr.mxu0 0.0
    %845 = vmatpush1.msra.mxu0 0.0
    %846 = vmatprep.subr.mxu0 0.0
    %847 = vmatpush1.msra.mxu0 0.0
    %848 = vmatprep.subr.mxu0 0.0
    %849 = vmatpush1.msra.mxu0 0.0
    %850 = vmatprep.subr.mxu0 0.0
    %851 = vmatpush1.msra.mxu0 0.0
    %852 = vmatprep.subr.mxu0 0.0
    %853 = vmatpush1.msra.mxu0 0.0
    %854 = vmatprep.subr.mxu0 0.0
    %855 = vmatpush1.msra.mxu0 0.0
    %856 = vmatprep.subr.mxu0 0.0
    %857 = vmatpush1.msra.mxu0 0.0
    %858 = vmatprep.subr.mxu0 0.0
    %859 = vmatpush1.msra.mxu0 0.0
    %860 = vmatprep.subr.mxu0 0.0
    %861 = vmatpush1.msra.mxu0 0.0
    %862 = vmatprep.subr.mxu0 0.0
    %863 = vmatpush1.msra.mxu0 0.0
    %864 = vmatprep.subr.mxu0 0.0
    %865 = vmatpush1.msra.mxu0 0.0
    %866 = vmatprep.mubr.f32.mxu0 0.0
    %867 = vmatmul.mubr.f32.gmra.mrb[0].mxu0 %v374
    %v868 = vpop.f32.mrb[0].mxu0
    %v869 = vadd.f32 0.0, %v868
    %v870 = vpop.f32.mrb[0].mxu0
    %v871 = vadd.f32 0.0, %v870
    %872 = vdwg.mxu0
    %873 = vmatprep.subr.mxu0 %v322
    %874 = vmatpush1.msra.mxu0 %v321
    %875 = vmatprep.subr.mxu0 %v338
    %876 = vmatpush1.msra.mxu0 %v337
    %877 = vmatprep.subr.mxu0 %v354
    %878 = vmatpush1.msra.mxu0 %v353
    %879 = vmatprep.subr.mxu0 %v370
    %880 = vmatpush1.msra.mxu0 %v369
    %881 = vmatprep.subr.mxu0 0.0
    %882 = vmatpush1.msra.mxu0 0.0
    %883 = vmatprep.subr.mxu0 0.0
    %884 = vmatpush1.msra.mxu0 0.0
    %885 = vmatprep.subr.mxu0 0.0
    %886 = vmatpush1.msra.mxu0 0.0
    %887 = vmatprep.subr.mxu0 0.0
    %888 = vmatpush1.msra.mxu0 0.0
    %889 = vmatprep.subr.mxu0 0.0
    %890 = vmatpush1.msra.mxu0 0.0
    %891 = vmatprep.subr.mxu0 0.0
    %892 = vmatpush1.msra.mxu0 0.0
    %893 = vmatprep.subr.mxu0 0.0
    %894 = vmatpush1.msra.mxu0 0.0
    %895 = vmatprep.subr.mxu0 0.0
    %896 = vmatpush1.msra.mxu0 0.0
    %897 = vmatprep.subr.mxu0 0.0
    %898 = vmatpush1.msra.mxu0 0.0
    %899 = vmatprep.subr.mxu0 0.0
    %900 = vmatpush1.msra.mxu0 0.0
    %901 = vmatprep.subr.mxu0 0.0
    %902 = vmatpush1.msra.mxu0 0.0
    %903 = vmatprep.subr.mxu0 0.0
    %904 = vmatpush1.msra.mxu0 0.0
    %905 = vmatprep.subr.mxu0 0.0
    %906 = vmatpush1.msra.mxu0 0.0
    %907 = vmatprep.subr.mxu0 0.0
    %908 = vmatpush1.msra.mxu0 0.0
    %909 = vmatprep.subr.mxu0 0.0
    %910 = vmatpush1.msra.mxu0 0.0
    %911 = vmatprep.subr.mxu0 0.0
    %912 = vmatpush1.msra.mxu0 0.0
    %913 = vmatprep.subr.mxu0 0.0
    %914 = vmatpush1.msra.mxu0 0.0
    %915 = vmatprep.subr.mxu0 0.0
    %916 = vmatpush1.msra.mxu0 0.0
    %917 = vmatprep.subr.mxu0 0.0
    %918 = vmatpush1.msra.mxu0 0.0
    %919 = vmatprep.subr.mxu0 0.0
    %920 = vmatpush1.msra.mxu0 0.0
    %921 = vmatprep.subr.mxu0 0.0
    %922 = vmatpush1.msra.mxu0 0.0
    %923 = vmatprep.subr.mxu0 0.0
    %924 = vmatpush1.msra.mxu0 0.0
    %925 = vmatprep.subr.mxu0 0.0
    %926 = vmatpush1.msra.mxu0 0.0
    %927 = vmatprep.subr.mxu0 0.0
    %928 = vmatpush1.msra.mxu0 0.0
    %929 = vmatprep.subr.mxu0 0.0
    %930 = vmatpush1.msra.mxu0 0.0
    %931 = vmatprep.subr.mxu0 0.0
    %932 = vmatpush1.msra.mxu0 0.0
    %933 = vmatprep.subr.mxu0 0.0
    %934 = vmatpush1.msra.mxu0 0.0
    %935 = vmatprep.subr.mxu0 0.0
    %936 = vmatpush1.msra.mxu0 0.0
    %937 = vmatprep.mubr.f32.mxu0 0.0
    %938 = vmatmul.mubr.f32.gmra.mrb[0].mxu0 %v374
    %v939 = vpop.f32.mrb[0].mxu0
    %v940 = vadd.f32 0.0, %v939
    %v941 = vpop.f32.mrb[0].mxu0
    %v942 = vadd.f32 0.0, %v941
    %943 = vdwg.mxu0
    %944 = vst [vmem:[#allocation7] sm:$0xff] %v443
    %945 = vst [vmem:[#allocation7 + $0x8] sm:$0xff] %v445
    %946 = vst [vmem:[#allocation7 + $0x10] sm:$0xff] %v514
    %947 = vst [vmem:[#allocation7 + $0x18] sm:$0xff] %v516
    %948 = vst [vmem:[#allocation7 + $0x20] sm:$0xff] %v585
    %949 = vst [vmem:[#allocation7 + $0x28] sm:$0xff] %v587
    %950 = vst [vmem:[#allocation7 + $0x30] sm:$0xff] %v656
    %951 = vst [vmem:[#allocation7 + $0x38] sm:$0xff] %v658
    %952 = vst [vmem:[#allocation7 + $0x40] sm:$0xff] %v727
    %953 = vst [vmem:[#allocation7 + $0x48] sm:$0xff] %v729
    %954 = vst [vmem:[#allocation7 + $0x50] sm:$0xff] %v798
    %955 = vst [vmem:[#allocation7 + $0x58] sm:$0xff] %v800
    %956 = vst [vmem:[#allocation7 + $0x60] sm:$0xff] %v869
    %957 = vst [vmem:[#allocation7 + $0x68] sm:$0xff] %v871
    %958 = vst [vmem:[#allocation7 + $0x70] sm:$0xff] %v940
    %959 = vst [vmem:[#allocation7 + $0x78] sm:$0xff] %v942
    // Predicated region
    $region18: #{tpu_custom_call.1} parent=1 // pred_check
      _
    $region19: #{tpu_custom_call.1} parent=1 // pred_check_branch
      %961 = sbr.rel (0) target = $region21
    $region20: #{tpu_custom_call.1} parent=1 // pred_region
      %s963 = ssub.s32 2048, 2048
      %964 = vsyncadd [#allocation4], %s963
      %s966 = sshll.u32 [#allocation7], 4
      %s967 = int_to_ptr.vmem [resolvable:$true] %s966
      %969 = dma.vmem_to_hbm [thread:$0]  %s967, 2048, %s2, [#allocation4]
    $region21: #{tpu_custom_call.1} parent=1 // pred_fallthru
      _
    // Predicated region
    $region22: #{tpu_custom_call.1} parent=1 // pred_check
      _
    $region23: #{tpu_custom_call.1} parent=1 // pred_check_branch
      %971 = sbr.rel (0) target = $region25
    $region24: #{tpu_custom_call.1} parent=1 // pred_region
      %972 = dma.done [#allocation4], 2048
    $region25: #{tpu_custom_call.1} parent=1 // pred_fallthru
      _
    %973 = vsyncpa [#allocation3], 1
    %974 = vsyncpa [#allocation6], 1
    %975 = vsyncpa [#allocation4], 1

</llo_original>
